<compile_context>
chip_gen: v6e
topology: v6e:2x2x1
jax: 0.10.0
libtpu: 0.0.40
codegen_flags: <defaults>
</compile_context>

<pallas_src>
import functools

import numpy as np
import jax
import jax.numpy as jnp
from jax.experimental import pallas as pl
from jax.experimental.pallas import tpu as pltpu

N_FEATURES = 10          # module default n_features
N_CLASSES = 3            # module default n_classes
CONV_CH = 32
KSIZE = 3
POOLED = N_FEATURES // 2            # 5
FLAT = CONV_CH * POOLED             # 32 * n_features // 2 = 160
H1, H2 = 128, 64
DEFAULT_TB = 2048                   # batch rows per grid block
VMEM_LIMIT = 32 * 1024 * 1024       # explicit scoped-VMEM cap (safe on v5e/v6e/v7x)


def _round_up(n, m):
    return ((n + m - 1) // m) * m


# ----------------------------------------------------------------------------- kernel ----
def baseline_kernel(x_ref, a_ref, bc_ref, w1_ref, b1_ref,
                    w2_ref, b2_ref, w3_ref, b3_ref, out_ref):
    # x arrives in its native (batch, feature) layout; transpose the tiny tile in-kernel
    # so every matmul / store is lane-dense (batch in lanes), then cast to bf16 operands.
    xT = jnp.transpose(x_ref[...])                                      # (L, TB) f32
    xb = xT.astype(jnp.bfloat16)

    # Fused conv head: one Toeplitz matmul; rows [0:FLAT) = even output positions,
    # rows [FLAT:2*FLAT) = odd output positions (channel-major, matching torch Flatten).
    y = jnp.dot(a_ref[...], xb, preferred_element_type=jnp.float32) + bc_ref[...]   # (2F, TB)
    # ReLU then MaxPool1d(2):  max(relu(e), relu(o)) == relu(max(e, o))
    flat = jnp.maximum(jnp.maximum(y[:FLAT, :], y[FLAT:, :]), 0.0)                   # (FLAT, TB)

    # MLP (Dropout layers are identity at inference).  bf16 operands, f32 accumulation.
    h1 = jnp.maximum(
        jnp.dot(w1_ref[...], flat.astype(jnp.bfloat16),
                preferred_element_type=jnp.float32) + b1_ref[...], 0.0)
    h2 = jnp.maximum(
        jnp.dot(w2_ref[...], h1.astype(jnp.bfloat16),
                preferred_element_type=jnp.float32) + b2_ref[...], 0.0)
    logits = jnp.dot(w3_ref[...], h2.astype(jnp.bfloat16),
                     preferred_element_type=jnp.float32) + b3_ref[...]               # (NC, TB)

    # Softmax over the class (sublane) axis; EUP approximate reciprocal for the denominator.
    m = jnp.max(logits, axis=0, keepdims=True)
    e = jnp.exp(logits - m)
    out_ref[...] = e * pl.reciprocal(jnp.sum(e, axis=0, keepdims=True), approx=True)


# --------------------------------------------------------------------- parameter setup ----
def init_params(key):
    """Deterministic PyTorch-style (uniform +-1/sqrt(fan_in)) init for all layers."""
    ks = jax.random.split(key, 8)

    def unif(k, shape, fan_in):
        bound = 1.0 / np.sqrt(fan_in)
        return jax.random.uniform(k, shape, jnp.float32, -bound, bound)

    return dict(
        wc=unif(ks[0], (CONV_CH, KSIZE), 1 * KSIZE),   # Conv1d weight (out_ch, k), in_ch = 1
        bc=unif(ks[1], (CONV_CH,), 1 * KSIZE),
        w1=unif(ks[2], (H1, FLAT), FLAT),              # Linear weights (out, in) like torch
        b1=unif(ks[3], (H1,), FLAT),
        w2=unif(ks[4], (H2, H1), H1),
        b2=unif(ks[5], (H2,), H1),
        w3=unif(ks[6], (N_CLASSES, H2), H2),
        b3=unif(ks[7], (N_CLASSES,), H2),
    )


# Static scatter pattern for the conv->Toeplitz lowering (shape-only, built once at import).
#   _CONV_MASK[part, p, k, j] = 1  iff  j == 2*p + part + k - 1  and  0 <= j < N_FEATURES
_mask = np.zeros((2, POOLED, KSIZE, N_FEATURES), np.float32)
for _part in range(2):
    for _p in range(POOLED):
        for _k in range(KSIZE):
            _j = 2 * _p + _part + _k - 1
            if 0 <= _j < N_FEATURES:
                _mask[_part, _p, _k, _j] = 1.0
_CONV_MASK = jnp.asarray(_mask)


def prepare_inference_params(params):
    """One-time (jittable) precompute of kernel-ready weights.

    Fused Toeplitz conv matrix + bf16 matmul weights + f32 column biases.
    Call once at parameter-load time — NOT inside the forward path.
    """
    a = jnp.einsum("ck,tpkj->tcpj", params["wc"], _CONV_MASK).reshape(2 * FLAT, N_FEATURES)
    bc = jnp.tile(jnp.repeat(params["bc"], POOLED), 2)[:, None]          # (2*FLAT, 1)
    return dict(
        a=a.astype(jnp.bfloat16), bc=bc.astype(jnp.float32),
        w1=params["w1"].astype(jnp.bfloat16), b1=params["b1"][:, None].astype(jnp.float32),
        w2=params["w2"].astype(jnp.bfloat16), b2=params["b2"][:, None].astype(jnp.float32),
        w3=params["w3"].astype(jnp.bfloat16), b3=params["b3"][:, None].astype(jnp.float32),
    )


# ----------------------------------------------------------------------------- tiling ----
def _choose_tb(batch, tb):
    """Lane-dense batch tile; single full-array block for tiny batches; >=2 grid steps
    (v7x dual-TC) for medium batches; capped at the requested tile for large batches."""
    tb = max(128, (int(tb) // 128) * 128)          # force a multiple of 128 lanes
    if batch <= 128:
        return batch                               # block == full array (always legal)
    target = _round_up(pl.cdiv(batch, 2), 128)     # aim for an even, >=2 step grid
    return min(tb, target)


# --------------------------------------------------------------------------- forward ----
@functools.partial(jax.jit, static_argnames=("tb",))
def baseline_forward(x, prep, *, tb=DEFAULT_TB):
    """x: (B, 1, n_features) float32 (PyTorch NCL). Returns (B, n_classes) softmax probs."""
    if x.shape[2] != N_FEATURES:            # mirrors the permute(0, 2, 1) in the torch forward
        x = jnp.transpose(x, (0, 2, 1))
    x2 = x[:, 0, :].astype(jnp.float32)     # squeeze in_channels=1 -> (B, L); free reshape

    B = x2.shape[0]
    TB = _choose_tb(B, tb)
    grid = (pl.cdiv(B, TB),)                # ragged last block handled by Pallas block padding

    def resident(shape):                    # weights/biases: fetched once, VMEM-resident
        return pl.BlockSpec(shape, lambda i: (0, 0))

    mm_macs = 2 * FLAT * N_FEATURES + H1 * FLAT + H2 * H1 + N_CLASSES * H2
    weight_bytes = mm_macs * 2 + (2 * FLAT + H1 + H2 + N_CLASSES) * 4
    cost = pl.CostEstimate(
        flops=2 * mm_macs * B,
        transcendentals=(N_CLASSES + 1) * B,
        bytes_accessed=(N_FEATURES + N_CLASSES) * 4 * B + weight_bytes,
    )

    out_t = pl.pallas_call(
        baseline_kernel,
        out_shape=jax.ShapeDtypeStruct((N_CLASSES, B), jnp.float32),
        grid=grid,
        in_specs=[
            pl.BlockSpec((TB, N_FEATURES), lambda i: (i, 0)),     # x streams in native layout
            resident((2 * FLAT, N_FEATURES)),                     # fused Toeplitz conv matrix
            resident((2 * FLAT, 1)),                              # conv bias (column)
            resident((H1, FLAT)), resident((H1, 1)),
            resident((H2, H1)), resident((H2, 1)),
            resident((N_CLASSES, H2)), resident((N_CLASSES, 1)),
        ],
        out_specs=pl.BlockSpec((N_CLASSES, TB), lambda i: (0, i)),
        compiler_params=pltpu.CompilerParams(
            dimension_semantics=("parallel",),                    # shards batch across v7x TCs
            vmem_limit_bytes=VMEM_LIMIT,
        ),
        cost_estimate=cost,
    )(x2, prep["a"], prep["bc"], prep["w1"], prep["b1"],
      prep["w2"], prep["b2"], prep["w3"], prep["b3"])

    return jnp.transpose(out_t)             # (B, n_classes); tiny (12 B/sample) reorder


# -------------------------------------------------------------------------- reference ----
def reference_forward(x, p):
    """Pure-JAX f32 reference reproducing the torch module (eval mode)."""
    if x.shape[2] != N_FEATURES:
        x = jnp.transpose(x, (0, 2, 1))
    xs = x[:, 0, :]
    xp = jnp.pad(xs, ((0, 0), (1, 1)))
    windows = jnp.stack([xp[:, i:i + KSIZE] for i in range(N_FEATURES)], axis=1)  # (B, L, K)
    conv = jnp.einsum("blk,ck->bcl", windows, p["wc"]) + p["bc"][None, :, None]
    conv = jnp.maximum(conv, 0.0)
    pooled = jnp.maximum(conv[:, :, 0::2], conv[:, :, 1::2])                       # (B, C, L//2)
    flat = pooled.reshape(xs.shape[0], -1)
    h1 = jnp.maximum(flat @ p["w1"].T + p["b1"], 0.0)
    h2 = jnp.maximum(h1 @ p["w2"].T + p["b2"], 0.0)
    logits = h2 @ p["w3"].T + p["b3"]
    return jax.nn.softmax(logits, axis=1)


if __name__ == "__main__":
    key = jax.random.PRNGKey(0)
    kp, kx1, kx2 = jax.random.split(key, 3)

    params = init_params(kp)
    prep = prepare_inference_params(params)   # hoisted one-time precompute (not per forward)

    # Small demo batch: (B, C=1, n_features), single full-array block.
    x_small = jax.random.normal(kx1, (8, 1, N_FEATURES), jnp.float32)
    out_small = jax.block_until_ready(baseline_forward(x_small, prep))
    np.testing.assert_allclose(np.asarray(out_small),
                               np.asarray(reference_forward(x_small, params)),
                               rtol=1e-2, atol=1e-2)   # bf16 operands + approx reciprocal
    assert out_small.shape == (8, N_CLASSES)

    # Larger batch: exercises the multi-block grid and the ragged last block (no input pad).
    x_big = jax.random.normal(kx2, (2500, 1, N_FEATURES), jnp.float32)
    out_big = jax.block_until_ready(baseline_forward(x_big, prep))
    np.testing.assert_allclose(np.asarray(out_big),
                               np.asarray(reference_forward(x_big, params)),
                               rtol=1e-2, atol=1e-2)
    assert out_big.shape == (2500, N_CLASSES)

    print("KERNEL_OK")
</pallas_src>

<mosaic_0001>
module attributes {stable_mosaic.version = 11 : i64} {
  func.func @baseline_kernel(%arg0: i32, %arg1: memref<8x10xf32, #tpu.memory_space<vmem>>, %arg2: memref<320x10xbf16, #tpu.memory_space<vmem>>, %arg3: memref<320x1xf32, #tpu.memory_space<vmem>>, %arg4: memref<128x160xbf16, #tpu.memory_space<vmem>>, %arg5: memref<128x1xf32, #tpu.memory_space<vmem>>, %arg6: memref<64x128xbf16, #tpu.memory_space<vmem>>, %arg7: memref<64x1xf32, #tpu.memory_space<vmem>>, %arg8: memref<3x64xbf16, #tpu.memory_space<vmem>>, %arg9: memref<3x1xf32, #tpu.memory_space<vmem>>, %arg10: memref<3x8xf32, #tpu.memory_space<vmem>>) attributes {dimension_semantics = [#tpu.dimension_semantics<parallel>], iteration_bounds = array<i64: 1>, scalar_prefetch = 0 : i64, scratch_operands = 0 : i64, tpu.core_type = #tpu.core_type<tc>, window_params = [{transform_indices = @transform_0, window_bounds = array<i64: 8, 10>}, {pipeline_mode = #tpu.pipeline_mode<synchronous>, transform_indices = @transform_1, window_bounds = array<i64: 320, 10>}, {pipeline_mode = #tpu.pipeline_mode<synchronous>, transform_indices = @transform_2, window_bounds = array<i64: 320, 1>}, {pipeline_mode = #tpu.pipeline_mode<synchronous>, transform_indices = @transform_3, window_bounds = array<i64: 128, 160>}, {pipeline_mode = #tpu.pipeline_mode<synchronous>, transform_indices = @transform_4, window_bounds = array<i64: 128, 1>}, {pipeline_mode = #tpu.pipeline_mode<synchronous>, transform_indices = @transform_5, window_bounds = array<i64: 64, 128>}, {pipeline_mode = #tpu.pipeline_mode<synchronous>, transform_indices = @transform_6, window_bounds = array<i64: 64, 1>}, {pipeline_mode = #tpu.pipeline_mode<synchronous>, transform_indices = @transform_7, window_bounds = array<i64: 3, 64>}, {pipeline_mode = #tpu.pipeline_mode<synchronous>, transform_indices = @transform_8, window_bounds = array<i64: 3, 1>}, {transform_indices = @transform_9, window_bounds = array<i64: 3, 8>}]} {
    %c0 = arith.constant 0 : index
    %c0_0 = arith.constant 0 : index
    %0 = vector.load %arg1[%c0, %c0_0] : memref<8x10xf32, #tpu.memory_space<vmem>>, vector<8x10xf32>
    %1 = tpu.transpose %0, [1, 0] : vector<8x10xf32> -> vector<10x8xf32>
    %2 = arith.truncf %1 : vector<10x8xf32> to vector<10x8xbf16>
    %c0_1 = arith.constant 0 : index
    %c0_2 = arith.constant 0 : index
    %3 = vector.load %arg2[%c0_1, %c0_2] : memref<320x10xbf16, #tpu.memory_space<vmem>>, vector<320x10xbf16>
    %cst = arith.constant dense<0.000000e+00> : vector<320x8xf32>
    %4 = tpu.matmul %3, %2, %cst {dimension_numbers = #tpu.dot_dimension_numbers<[1], [0], [0], [1], [0, 0, 1, 1], [], []>} : vector<320x10xbf16>, vector<10x8xbf16>, vector<320x8xf32> -> vector<320x8xf32>
    %c0_3 = arith.constant 0 : index
    %c0_4 = arith.constant 0 : index
    %5 = vector.load %arg3[%c0_3, %c0_4] : memref<320x1xf32, #tpu.memory_space<vmem>>, vector<320x1xf32>
    %6 = vector.broadcast %5 : vector<320x1xf32> to vector<320x8xf32>
    %7 = arith.addf %4, %6 : vector<320x8xf32>
    %8 = vector.extract_strided_slice %7 {offsets = [0, 0], sizes = [160, 8], strides = [1, 1]} : vector<320x8xf32> to vector<160x8xf32>
    %9 = vector.extract_strided_slice %7 {offsets = [160, 0], sizes = [160, 8], strides = [1, 1]} : vector<320x8xf32> to vector<160x8xf32>
    %10 = arith.maximumf %8, %9 : vector<160x8xf32>
    %cst_5 = arith.constant 0.000000e+00 : f32
    %11 = vector.broadcast %cst_5 : f32 to vector<160x8xf32>
    %12 = arith.maximumf %10, %11 : vector<160x8xf32>
    %c0_6 = arith.constant 0 : index
    %c0_7 = arith.constant 0 : index
    %13 = vector.load %arg4[%c0_6, %c0_7] : memref<128x160xbf16, #tpu.memory_space<vmem>>, vector<128x160xbf16>
    %14 = arith.truncf %12 : vector<160x8xf32> to vector<160x8xbf16>
    %cst_8 = arith.constant dense<0.000000e+00> : vector<128x8xf32>
    %15 = tpu.matmul %13, %14, %cst_8 {dimension_numbers = #tpu.dot_dimension_numbers<[1], [0], [0], [1], [0, 0, 1, 1], [], []>} : vector<128x160xbf16>, vector<160x8xbf16>, vector<128x8xf32> -> vector<128x8xf32>
    %c0_9 = arith.constant 0 : index
    %c0_10 = arith.constant 0 : index
    %16 = vector.load %arg5[%c0_9, %c0_10] : memref<128x1xf32, #tpu.memory_space<vmem>>, vector<128x1xf32>
    %17 = vector.broadcast %16 : vector<128x1xf32> to vector<128x8xf32>
    %18 = arith.addf %15, %17 : vector<128x8xf32>
    %cst_11 = arith.constant 0.000000e+00 : f32
    %19 = vector.broadcast %cst_11 : f32 to vector<128x8xf32>
    %20 = arith.maximumf %18, %19 : vector<128x8xf32>
    %c0_12 = arith.constant 0 : index
    %c0_13 = arith.constant 0 : index
    %21 = vector.load %arg6[%c0_12, %c0_13] : memref<64x128xbf16, #tpu.memory_space<vmem>>, vector<64x128xbf16>
    %22 = arith.truncf %20 : vector<128x8xf32> to vector<128x8xbf16>
    %cst_14 = arith.constant dense<0.000000e+00> : vector<64x8xf32>
    %23 = tpu.matmul %21, %22, %cst_14 {dimension_numbers = #tpu.dot_dimension_numbers<[1], [0], [0], [1], [0, 0, 1, 1], [], []>} : vector<64x128xbf16>, vector<128x8xbf16>, vector<64x8xf32> -> vector<64x8xf32>
    %c0_15 = arith.constant 0 : index
    %c0_16 = arith.constant 0 : index
    %24 = vector.load %arg7[%c0_15, %c0_16] : memref<64x1xf32, #tpu.memory_space<vmem>>, vector<64x1xf32>
    %25 = vector.broadcast %24 : vector<64x1xf32> to vector<64x8xf32>
    %26 = arith.addf %23, %25 : vector<64x8xf32>
    %cst_17 = arith.constant 0.000000e+00 : f32
    %27 = vector.broadcast %cst_17 : f32 to vector<64x8xf32>
    %28 = arith.maximumf %26, %27 : vector<64x8xf32>
    %c0_18 = arith.constant 0 : index
    %c0_19 = arith.constant 0 : index
    %29 = vector.load %arg8[%c0_18, %c0_19] : memref<3x64xbf16, #tpu.memory_space<vmem>>, vector<3x64xbf16>
    %30 = arith.truncf %28 : vector<64x8xf32> to vector<64x8xbf16>
    %cst_20 = arith.constant dense<0.000000e+00> : vector<3x8xf32>
    %31 = tpu.matmul %29, %30, %cst_20 {dimension_numbers = #tpu.dot_dimension_numbers<[1], [0], [0], [1], [0, 0, 1, 1], [], []>} : vector<3x64xbf16>, vector<64x8xbf16>, vector<3x8xf32> -> vector<3x8xf32>
    %c0_21 = arith.constant 0 : index
    %c0_22 = arith.constant 0 : index
    %32 = vector.load %arg9[%c0_21, %c0_22] : memref<3x1xf32, #tpu.memory_space<vmem>>, vector<3x1xf32>
    %33 = vector.broadcast %32 : vector<3x1xf32> to vector<3x8xf32>
    %34 = arith.addf %31, %33 : vector<3x8xf32>
    %cst_23 = arith.constant dense<0xFF800000> : vector<8xf32>
    %35 = vector.multi_reduction <maximumf>, %34, %cst_23 [0] : vector<3x8xf32> to vector<8xf32>
    %36 = vector.shape_cast %35 : vector<8xf32> to vector<1x8xf32>
    %37 = vector.broadcast %36 : vector<1x8xf32> to vector<3x8xf32>
    %38 = arith.subf %34, %37 : vector<3x8xf32>
    %39 = math.exp %38 : vector<3x8xf32>
    %cst_24 = arith.constant dense<0.000000e+00> : vector<8xf32>
    %40 = vector.multi_reduction <add>, %39, %cst_24 [0] : vector<3x8xf32> to vector<8xf32>
    %41 = vector.shape_cast %40 : vector<8xf32> to vector<1x8xf32>
    %42 = tpu.reciprocal %41 {approx = true} : vector<1x8xf32> -> vector<1x8xf32>
    %43 = vector.broadcast %42 : vector<1x8xf32> to vector<3x8xf32>
    %44 = arith.mulf %39, %43 : vector<3x8xf32>
    %c0_25 = arith.constant 0 : index
    %c0_26 = arith.constant 0 : index
    %45 = vector.load %arg10[%c0_25, %c0_26] : memref<3x8xf32, #tpu.memory_space<vmem>>, vector<3x8xf32>
    tpu.vector_store %arg10[%c0_25, %c0_26], %44 {strides = array<i32>} : memref<3x8xf32, #tpu.memory_space<vmem>>, vector<3x8xf32>,
    return
  }
  func.func @transform_0(%arg0: i32) -> (i32, i32) {
    %c0_i32 = arith.constant 0 : i32
    %c0_i32_0 = arith.constant 0 : i32
    return %arg0, %c0_i32 : i32, i32
  }
  func.func @transform_1(%arg0: i32) -> (i32, i32) {
    %c0_i32 = arith.constant 0 : i32
    %c0_i32_0 = arith.constant 0 : i32
    %c0_i32_1 = arith.constant 0 : i32
    return %c0_i32, %c0_i32_0 : i32, i32
  }
  func.func @transform_2(%arg0: i32) -> (i32, i32) {
    %c0_i32 = arith.constant 0 : i32
    %c0_i32_0 = arith.constant 0 : i32
    %c0_i32_1 = arith.constant 0 : i32
    return %c0_i32, %c0_i32_0 : i32, i32
  }
  func.func @transform_3(%arg0: i32) -> (i32, i32) {
    %c0_i32 = arith.constant 0 : i32
    %c0_i32_0 = arith.constant 0 : i32
    %c0_i32_1 = arith.constant 0 : i32
    return %c0_i32, %c0_i32_0 : i32, i32
  }
  func.func @transform_4(%arg0: i32) -> (i32, i32) {
    %c0_i32 = arith.constant 0 : i32
    %c0_i32_0 = arith.constant 0 : i32
    %c0_i32_1 = arith.constant 0 : i32
    return %c0_i32, %c0_i32_0 : i32, i32
  }
  func.func @transform_5(%arg0: i32) -> (i32, i32) {
    %c0_i32 = arith.constant 0 : i32
    %c0_i32_0 = arith.constant 0 : i32
    %c0_i32_1 = arith.constant 0 : i32
    return %c0_i32, %c0_i32_0 : i32, i32
  }
  func.func @transform_6(%arg0: i32) -> (i32, i32) {
    %c0_i32 = arith.constant 0 : i32
    %c0_i32_0 = arith.constant 0 : i32
    %c0_i32_1 = arith.constant 0 : i32
    return %c0_i32, %c0_i32_0 : i32, i32
  }
  func.func @transform_7(%arg0: i32) -> (i32, i32) {
    %c0_i32 = arith.constant 0 : i32
    %c0_i32_0 = arith.constant 0 : i32
    %c0_i32_1 = arith.constant 0 : i32
    return %c0_i32, %c0_i32_0 : i32, i32
  }
  func.func @transform_8(%arg0: i32) -> (i32, i32) {
    %c0_i32 = arith.constant 0 : i32
    %c0_i32_0 = arith.constant 0 : i32
    %c0_i32_1 = arith.constant 0 : i32
    return %c0_i32, %c0_i32_0 : i32, i32
  }
  func.func @transform_9(%arg0: i32) -> (i32, i32) {
    %c0_i32 = arith.constant 0 : i32
    %c0_i32_0 = arith.constant 0 : i32
    return %c0_i32, %arg0 : i32, i32
  }
}

</mosaic_0001>

<llo_original>
// kernel: baseline_forward.1
$region0: #{baseline_forward.1}
  #allocation0 [shape = 'u32[]', space=smem, size = 0x4, offset = 0x4, fixed_abs, tag = 'smem constant byte address 0x4 - core index']
  #allocation1 [shape = 'u32[144,128]{1,0:T(1,128)}', space=vmem, size = 0x12000, scoped, tag = 'internal scratch']
  %s0 = inlined_call_operand.vmem [shape: f32[8,10], index: 0, kind: input, shape index: {}]
  %s1 = inlined_call_operand.vmem [shape: bf16[320,10], index: 1, kind: input, shape index: {}]
  %s2 = inlined_call_operand.vmem [shape: f32[320,1], index: 2, kind: input, shape index: {}]
  %s3 = inlined_call_operand.vmem [shape: bf16[128,160], index: 3, kind: input, shape index: {}]
  %s4 = inlined_call_operand.vmem [shape: f32[128,1], index: 4, kind: input, shape index: {}]
  %s5 = inlined_call_operand.vmem [shape: bf16[64,128], index: 5, kind: input, shape index: {}]
  %s6 = inlined_call_operand.vmem [shape: f32[64,1], index: 6, kind: input, shape index: {}]
  %s7 = inlined_call_operand.vmem [shape: bf16[3,64], index: 7, kind: input, shape index: {}]
  %s8 = inlined_call_operand.vmem [shape: f32[3,1], index: 8, kind: input, shape index: {}]
  %s9 = inlined_call_operand.hbm [shape: f32[3,8], index: 9, kind: output, shape index: {}]
  %s10 = sld [smem:[#allocation0]]
  $region46: #{baseline_forward.1} parent=0
    _
  %s12 = ssub.s32 1, %s10
  %s13 = scalar_select 0, %s12, %s10
  $region1: #{baseline_forward.1} parent=0
    #allocation2 [shape = 'u8[2048]{0}', space=vmem, size = 0x800, scoped, tag = 'output window, operand 0, single buffered']
    #allocation3 [shape = 's32[1]{0}', space=sflag, size = 0x4, scoped, tag = 'scoped memory for baseline_forward.1']
    %14 = vsyncpa [#allocation3], 0
    // Predicated region
    $region2: #{baseline_forward.1} parent=1 // pred_check
      _
    $region3: #{baseline_forward.1} parent=1 // pred_check_branch
      %16 = sbr.rel (0) target = $region5
    $region4: #{baseline_forward.1} parent=1 // pred_region
      _
    $region5: #{baseline_forward.1} parent=1 // pred_fallthru
      _
    // Predicated region
    $region6: #{baseline_forward.1} parent=1 // pred_check
      _
    $region7: #{baseline_forward.1} parent=1 // pred_check_branch
      %18 = sbr.rel (0) target = $region9
    $region8: #{baseline_forward.1} parent=1 // pred_region
      _
    $region9: #{baseline_forward.1} parent=1 // pred_fallthru
      _
    // Predicated region
    $region10: #{baseline_forward.1} parent=1 // pred_check
      _
    $region11: #{baseline_forward.1} parent=1 // pred_check_branch
      %20 = sbr.rel (0) target = $region13
    $region12: #{baseline_forward.1} parent=1 // pred_region
      _
    $region13: #{baseline_forward.1} parent=1 // pred_fallthru
      _
    // Predicated region
    $region14: #{baseline_forward.1} parent=1 // pred_check
      _
    $region15: #{baseline_forward.1} parent=1 // pred_check_branch
      %22 = sbr.rel (0) target = $region17
    $region16: #{baseline_forward.1} parent=1 // pred_region
      _
    $region17: #{baseline_forward.1} parent=1 // pred_fallthru
      _
    // Predicated region
    $region18: #{baseline_forward.1} parent=1 // pred_check
      _
    $region19: #{baseline_forward.1} parent=1 // pred_check_branch
      %24 = sbr.rel (0) target = $region21
    $region20: #{baseline_forward.1} parent=1 // pred_region
      _
    $region21: #{baseline_forward.1} parent=1 // pred_fallthru
      _
    // Predicated region
    $region22: #{baseline_forward.1} parent=1 // pred_check
      _
    $region23: #{baseline_forward.1} parent=1 // pred_check_branch
      %26 = sbr.rel (0) target = $region25
    $region24: #{baseline_forward.1} parent=1 // pred_region
      _
    $region25: #{baseline_forward.1} parent=1 // pred_fallthru
      _
    // Predicated region
    $region26: #{baseline_forward.1} parent=1 // pred_check
      _
    $region27: #{baseline_forward.1} parent=1 // pred_check_branch
      %28 = sbr.rel (0) target = $region29
    $region28: #{baseline_forward.1} parent=1 // pred_region
      _
    $region29: #{baseline_forward.1} parent=1 // pred_fallthru
      _
    // Predicated region
    $region30: #{baseline_forward.1} parent=1 // pred_check
      _
    $region31: #{baseline_forward.1} parent=1 // pred_check_branch
      %30 = sbr.rel (0) target = $region33
    $region32: #{baseline_forward.1} parent=1 // pred_region
      _
    $region33: #{baseline_forward.1} parent=1 // pred_fallthru
      _
    // Predicated region
    $region34: #{baseline_forward.1} parent=1 // pred_check
      _
    $region35: #{baseline_forward.1} parent=1 // pred_check_branch
      %32 = sbr.rel (0) target = $region37
    $region36: #{baseline_forward.1} parent=1 // pred_region
      _
    $region37: #{baseline_forward.1} parent=1 // pred_fallthru
      _
    %v34 = vld [vmem:[%s0] sm:$0xff]
    %35 = vxpose.xlu0.b32.start [1/16] %v34, 128
    %36 = vxpose.xlu0.b32.cont [2/16] 0.0, 128
    %37 = vxpose.xlu0.b32.cont [3/16] 0.0, 128
    %38 = vxpose.xlu0.b32.cont [4/16] 0.0, 128
    %39 = vxpose.xlu0.b32.cont [5/16] 0.0, 128
    %40 = vxpose.xlu0.b32.cont [6/16] 0.0, 128
    %41 = vxpose.xlu0.b32.cont [7/16] 0.0, 128
    %42 = vxpose.xlu0.b32.cont [8/16] 0.0, 128
    %43 = vxpose.xlu0.b32.cont [9/16] 0.0, 128
    %44 = vxpose.xlu0.b32.cont [10/16] 0.0, 128
    %45 = vxpose.xlu0.b32.cont [11/16] 0.0, 128
    %46 = vxpose.xlu0.b32.cont [12/16] 0.0, 128
    %47 = vxpose.xlu0.b32.cont [13/16] 0.0, 128
    %48 = vxpose.xlu0.b32.cont [14/16] 0.0, 128
    %49 = vxpose.xlu0.b32.cont [15/16] 0.0, 128
    %50 = vxpose.xlu0.b32.end [16/16] 0.0, 128
    %v51 = vpop.trf.xlu0
    %v52 = vpop.trf.xlu0
    %v53 = vpop.trf.xlu0
    %v54 = vpop.trf.xlu0
    %v55 = vpop.trf.xlu0
    %v56 = vpop.trf.xlu0
    %v57 = vpop.trf.xlu0
    %v58 = vpop.trf.xlu0
    %v59 = vpop.trf.xlu0
    %v60 = vpop.trf.xlu0
    %v61 = vpop.trf.xlu0
    %v62 = vpop.trf.xlu0
    %v63 = vpop.trf.xlu0
    %v64 = vpop.trf.xlu0
    %v65 = vpop.trf.xlu0
    %v66 = vpop.trf.xlu0
    %v67 = vpack.c.bf16 %v52, %v51
    %v68 = vld [vmem:[%s1] sm:$0xf]
    %v69 = vld [vmem:[%s1 + $0x4] sm:$0xf]
    %v70 = vld [vmem:[%s1 + $0x8] sm:$0xf]
    %v71 = vld [vmem:[%s1 + $0xc] sm:$0xf]
    %v72 = vld [vmem:[%s1 + $0x10] sm:$0xf]
    %v73 = vld [vmem:[%s1 + $0x14] sm:$0xf]
    %v74 = vld [vmem:[%s1 + $0x18] sm:$0xf]
    %v75 = vld [vmem:[%s1 + $0x1c] sm:$0xf]
    %v76 = vld [vmem:[%s1 + $0x20] sm:$0xf]
    %v77 = vld [vmem:[%s1 + $0x24] sm:$0xf]
    %v78 = vld [vmem:[%s1 + $0x28] sm:$0xf]
    %v79 = vld [vmem:[%s1 + $0x2c] sm:$0xf]
    %v80 = vld [vmem:[%s1 + $0x30] sm:$0xf]
    %v81 = vld [vmem:[%s1 + $0x34] sm:$0xf]
    %v82 = vld [vmem:[%s1 + $0x38] sm:$0xf]
    %v83 = vld [vmem:[%s1 + $0x3c] sm:$0xf]
    %v84 = vld [vmem:[%s1 + $0x40] sm:$0xf]
    %v85 = vld [vmem:[%s1 + $0x44] sm:$0xf]
    %v86 = vld [vmem:[%s1 + $0x48] sm:$0xf]
    %v87 = vld [vmem:[%s1 + $0x4c] sm:$0xf]
    %v88 = vld [vmem:[%s1 + $0x50] sm:$0xf]
    %v89 = vld [vmem:[%s1 + $0x54] sm:$0xf]
    %v90 = vld [vmem:[%s1 + $0x58] sm:$0xf]
    %v91 = vld [vmem:[%s1 + $0x5c] sm:$0xf]
    %v92 = vld [vmem:[%s1 + $0x60] sm:$0xf]
    %v93 = vld [vmem:[%s1 + $0x64] sm:$0xf]
    %v94 = vld [vmem:[%s1 + $0x68] sm:$0xf]
    %v95 = vld [vmem:[%s1 + $0x6c] sm:$0xf]
    %v96 = vld [vmem:[%s1 + $0x70] sm:$0xf]
    %v97 = vld [vmem:[%s1 + $0x74] sm:$0xf]
    %v98 = vld [vmem:[%s1 + $0x78] sm:$0xf]
    %v99 = vld [vmem:[%s1 + $0x7c] sm:$0xf]
    %v100 = vld [vmem:[%s1 + $0x80] sm:$0xf]
    %v101 = vld [vmem:[%s1 + $0x84] sm:$0xf]
    %v102 = vld [vmem:[%s1 + $0x88] sm:$0xf]
    %v103 = vld [vmem:[%s1 + $0x8c] sm:$0xf]
    %v104 = vld [vmem:[%s1 + $0x90] sm:$0xf]
    %v105 = vld [vmem:[%s1 + $0x94] sm:$0xf]
    %v106 = vld [vmem:[%s1 + $0x98] sm:$0xf]
    %v107 = vld [vmem:[%s1 + $0x9c] sm:$0xf]
    %v108 = vld [vmem:[%s2] sm:$0xff]
    %v109 = vld [vmem:[%s2 + $0x8] sm:$0xff]
    %v110 = vld [vmem:[%s2 + $0x10] sm:$0xff]
    %v111 = vld [vmem:[%s2 + $0x18] sm:$0xff]
    %v112 = vld [vmem:[%s2 + $0x20] sm:$0xff]
    %v113 = vld [vmem:[%s2 + $0x28] sm:$0xff]
    %v114 = vld [vmem:[%s2 + $0x30] sm:$0xff]
    %v115 = vld [vmem:[%s2 + $0x38] sm:$0xff]
    %v116 = vld [vmem:[%s2 + $0x40] sm:$0xff]
    %v117 = vld [vmem:[%s2 + $0x48] sm:$0xff]
    %v118 = vld [vmem:[%s2 + $0x50] sm:$0xff]
    %v119 = vld [vmem:[%s2 + $0x58] sm:$0xff]
    %v120 = vld [vmem:[%s2 + $0x60] sm:$0xff]
    %v121 = vld [vmem:[%s2 + $0x68] sm:$0xff]
    %v122 = vld [vmem:[%s2 + $0x70] sm:$0xff]
    %v123 = vld [vmem:[%s2 + $0x78] sm:$0xff]
    %v124 = vld [vmem:[%s2 + $0x80] sm:$0xff]
    %v125 = vld [vmem:[%s2 + $0x88] sm:$0xff]
    %v126 = vld [vmem:[%s2 + $0x90] sm:$0xff]
    %v127 = vld [vmem:[%s2 + $0x98] sm:$0xff]
    %v128 = vld [vmem:[%s2 + $0xa0] sm:$0xff]
    %v129 = vld [vmem:[%s2 + $0xa8] sm:$0xff]
    %v130 = vld [vmem:[%s2 + $0xb0] sm:$0xff]
    %v131 = vld [vmem:[%s2 + $0xb8] sm:$0xff]
    %v132 = vld [vmem:[%s2 + $0xc0] sm:$0xff]
    %v133 = vld [vmem:[%s2 + $0xc8] sm:$0xff]
    %v134 = vld [vmem:[%s2 + $0xd0] sm:$0xff]
    %v135 = vld [vmem:[%s2 + $0xd8] sm:$0xff]
    %v136 = vld [vmem:[%s2 + $0xe0] sm:$0xff]
    %v137 = vld [vmem:[%s2 + $0xe8] sm:$0xff]
    %v138 = vld [vmem:[%s2 + $0xf0] sm:$0xff]
    %v139 = vld [vmem:[%s2 + $0xf8] sm:$0xff]
    %v140 = vld [vmem:[%s2 + $0x100] sm:$0xff]
    %v141 = vld [vmem:[%s2 + $0x108] sm:$0xff]
    %v142 = vld [vmem:[%s2 + $0x110] sm:$0xff]
    %v143 = vld [vmem:[%s2 + $0x118] sm:$0xff]
    %v144 = vld [vmem:[%s2 + $0x120] sm:$0xff]
    %v145 = vld [vmem:[%s2 + $0x128] sm:$0xff]
    %v146 = vld [vmem:[%s2 + $0x130] sm:$0xff]
    %v147 = vld [vmem:[%s2 + $0x138] sm:$0xff]
    %149 = vset.pattern.permute.xlu0 0
    %150 = vperm.xlu0 %149, %v108
    %v151 = vpop.permute.xlu0 %150
    %154 = vset.pattern.permute.xlu0 0
    %155 = vperm.xlu0 %154, %v109
    %v156 = vpop.permute.xlu0 %155
    %159 = vset.pattern.permute.xlu0 0
    %160 = vperm.xlu0 %159, %v110
    %v161 = vpop.permute.xlu0 %160
    %164 = vset.pattern.permute.xlu0 0
    %165 = vperm.xlu0 %164, %v111
    %v166 = vpop.permute.xlu0 %165
    %169 = vset.pattern.permute.xlu0 0
    %170 = vperm.xlu0 %169, %v112
    %v171 = vpop.permute.xlu0 %170
    %174 = vset.pattern.permute.xlu0 0
    %175 = vperm.xlu0 %174, %v113
    %v176 = vpop.permute.xlu0 %175
    %179 = vset.pattern.permute.xlu0 0
    %180 = vperm.xlu0 %179, %v114
    %v181 = vpop.permute.xlu0 %180
    %184 = vset.pattern.permute.xlu0 0
    %185 = vperm.xlu0 %184, %v115
    %v186 = vpop.permute.xlu0 %185
    %189 = vset.pattern.permute.xlu0 0
    %190 = vperm.xlu0 %189, %v116
    %v191 = vpop.permute.xlu0 %190
    %194 = vset.pattern.permute.xlu0 0
    %195 = vperm.xlu0 %194, %v117
    %v196 = vpop.permute.xlu0 %195
    %199 = vset.pattern.permute.xlu0 0
    %200 = vperm.xlu0 %199, %v118
    %v201 = vpop.permute.xlu0 %200
    %204 = vset.pattern.permute.xlu0 0
    %205 = vperm.xlu0 %204, %v119
    %v206 = vpop.permute.xlu0 %205
    %209 = vset.pattern.permute.xlu0 0
    %210 = vperm.xlu0 %209, %v120
    %v211 = vpop.permute.xlu0 %210
    %214 = vset.pattern.permute.xlu0 0
    %215 = vperm.xlu0 %214, %v121
    %v216 = vpop.permute.xlu0 %215
    %219 = vset.pattern.permute.xlu0 0
    %220 = vperm.xlu0 %219, %v122
    %v221 = vpop.permute.xlu0 %220
    %224 = vset.pattern.permute.xlu0 0
    %225 = vperm.xlu0 %224, %v123
    %v226 = vpop.permute.xlu0 %225
    %229 = vset.pattern.permute.xlu0 0
    %230 = vperm.xlu0 %229, %v124
    %v231 = vpop.permute.xlu0 %230
    %234 = vset.pattern.permute.xlu0 0
    %235 = vperm.xlu0 %234, %v125
    %v236 = vpop.permute.xlu0 %235
    %239 = vset.pattern.permute.xlu0 0
    %240 = vperm.xlu0 %239, %v126
    %v241 = vpop.permute.xlu0 %240
    %244 = vset.pattern.permute.xlu0 0
    %245 = vperm.xlu0 %244, %v127
    %v246 = vpop.permute.xlu0 %245
    %249 = vset.pattern.permute.xlu0 0
    %250 = vperm.xlu0 %249, %v128
    %v251 = vpop.permute.xlu0 %250
    %254 = vset.pattern.permute.xlu0 0
    %255 = vperm.xlu0 %254, %v129
    %v256 = vpop.permute.xlu0 %255
    %259 = vset.pattern.permute.xlu0 0
    %260 = vperm.xlu0 %259, %v130
    %v261 = vpop.permute.xlu0 %260
    %264 = vset.pattern.permute.xlu0 0
    %265 = vperm.xlu0 %264, %v131
    %v266 = vpop.permute.xlu0 %265
    %269 = vset.pattern.permute.xlu0 0
    %270 = vperm.xlu0 %269, %v132
    %v271 = vpop.permute.xlu0 %270
    %274 = vset.pattern.permute.xlu0 0
    %275 = vperm.xlu0 %274, %v133
    %v276 = vpop.permute.xlu0 %275
    %279 = vset.pattern.permute.xlu0 0
    %280 = vperm.xlu0 %279, %v134
    %v281 = vpop.permute.xlu0 %280
    %284 = vset.pattern.permute.xlu0 0
    %285 = vperm.xlu0 %284, %v135
    %v286 = vpop.permute.xlu0 %285
    %289 = vset.pattern.permute.xlu0 0
    %290 = vperm.xlu0 %289, %v136
    %v291 = vpop.permute.xlu0 %290
    %294 = vset.pattern.permute.xlu0 0
    %295 = vperm.xlu0 %294, %v137
    %v296 = vpop.permute.xlu0 %295
    %299 = vset.pattern.permute.xlu0 0
    %300 = vperm.xlu0 %299, %v138
    %v301 = vpop.permute.xlu0 %300
    %304 = vset.pattern.permute.xlu0 0
    %305 = vperm.xlu0 %304, %v139
    %v306 = vpop.permute.xlu0 %305
    %309 = vset.pattern.permute.xlu0 0
    %310 = vperm.xlu0 %309, %v140
    %v311 = vpop.permute.xlu0 %310
    %314 = vset.pattern.permute.xlu0 0
    %315 = vperm.xlu0 %314, %v141
    %v316 = vpop.permute.xlu0 %315
    %319 = vset.pattern.permute.xlu0 0
    %320 = vperm.xlu0 %319, %v142
    %v321 = vpop.permute.xlu0 %320
    %324 = vset.pattern.permute.xlu0 0
    %325 = vperm.xlu0 %324, %v143
    %v326 = vpop.permute.xlu0 %325
    %329 = vset.pattern.permute.xlu0 0
    %330 = vperm.xlu0 %329, %v144
    %v331 = vpop.permute.xlu0 %330
    %334 = vset.pattern.permute.xlu0 0
    %335 = vperm.xlu0 %334, %v145
    %v336 = vpop.permute.xlu0 %335
    %339 = vset.pattern.permute.xlu0 0
    %340 = vperm.xlu0 %339, %v146
    %v341 = vpop.permute.xlu0 %340
    %344 = vset.pattern.permute.xlu0 0
    %345 = vperm.xlu0 %344, %v147
    %v346 = vpop.permute.xlu0 %345
    %v388 = vunpack.c.l.b16 %v68
    %v389 = vunpack.c.l.b16 %v69
    %v390 = vunpack.c.l.b16 %v70
    %v391 = vunpack.c.l.b16 %v71
    %v392 = vunpack.c.l.b16 %v72
    %v393 = vunpack.c.l.b16 %v73
    %v394 = vunpack.c.l.b16 %v74
    %v395 = vunpack.c.l.b16 %v75
    %v396 = vunpack.c.l.b16 %v76
    %v397 = vunpack.c.l.b16 %v77
    %v398 = vunpack.c.l.b16 %v78
    %v399 = vunpack.c.l.b16 %v79
    %v400 = vunpack.c.l.b16 %v80
    %v401 = vunpack.c.l.b16 %v81
    %v402 = vunpack.c.l.b16 %v82
    %v403 = vunpack.c.l.b16 %v83
    %v404 = vunpack.c.l.b16 %v84
    %v405 = vunpack.c.l.b16 %v85
    %v406 = vunpack.c.l.b16 %v86
    %v407 = vunpack.c.l.b16 %v87
    %v408 = vunpack.c.l.b16 %v88
    %v409 = vunpack.c.l.b16 %v89
    %v410 = vunpack.c.l.b16 %v90
    %v411 = vunpack.c.l.b16 %v91
    %v412 = vunpack.c.l.b16 %v92
    %v413 = vunpack.c.l.b16 %v93
    %v414 = vunpack.c.l.b16 %v94
    %v415 = vunpack.c.l.b16 %v95
    %v416 = vunpack.c.l.b16 %v96
    %v417 = vunpack.c.l.b16 %v97
    %v418 = vunpack.c.l.b16 %v98
    %v419 = vunpack.c.l.b16 %v99
    %v420 = vunpack.c.l.b16 %v100
    %v421 = vunpack.c.l.b16 %v101
    %v422 = vunpack.c.l.b16 %v102
    %v423 = vunpack.c.l.b16 %v103
    %v424 = vunpack.c.l.b16 %v104
    %v425 = vunpack.c.l.b16 %v105
    %v426 = vunpack.c.l.b16 %v106
    %v427 = vunpack.c.l.b16 %v107
    %v428 = vpack.c.b16 %v389, %v388
    %v429 = vpack.c.b16 %v391, %v390
    %v430 = vpack.c.b16 %v393, %v392
    %v431 = vpack.c.b16 %v395, %v394
    %v432 = vpack.c.b16 %v397, %v396
    %v433 = vpack.c.b16 %v399, %v398
    %v434 = vpack.c.b16 %v401, %v400
    %v435 = vpack.c.b16 %v403, %v402
    %v436 = vpack.c.b16 %v405, %v404
    %v437 = vpack.c.b16 %v407, %v406
    %v438 = vpack.c.b16 %v409, %v408
    %v439 = vpack.c.b16 %v411, %v410
    %v440 = vpack.c.b16 %v413, %v412
    %v441 = vpack.c.b16 %v415, %v414
    %v442 = vpack.c.b16 %v417, %v416
    %v443 = vpack.c.b16 %v419, %v418
    %v444 = vpack.c.b16 %v421, %v420
    %v445 = vpack.c.b16 %v423, %v422
    %v446 = vpack.c.b16 %v425, %v424
    %v447 = vpack.c.b16 %v427, %v426
    %vm448 = vcmask 80896
    %v450 = vsel %vm448, %v428, 0
    %v453 = vsel %vm448, %v429, 0
    %v456 = vsel %vm448, %v430, 0
    %v459 = vsel %vm448, %v431, 0
    %v462 = vsel %vm448, %v432, 0
    %v465 = vsel %vm448, %v433, 0
    %v468 = vsel %vm448, %v434, 0
    %v471 = vsel %vm448, %v435, 0
    %v474 = vsel %vm448, %v436, 0
    %v477 = vsel %vm448, %v437, 0
    %v480 = vsel %vm448, %v438, 0
    %v483 = vsel %vm448, %v439, 0
    %v486 = vsel %vm448, %v440, 0
    %v489 = vsel %vm448, %v441, 0
    %v492 = vsel %vm448, %v442, 0
    %v495 = vsel %vm448, %v443, 0
    %v498 = vsel %vm448, %v444, 0
    %v501 = vsel %vm448, %v445, 0
    %v504 = vsel %vm448, %v446, 0
    %v507 = vsel %vm448, %v447, 0
    %vm509 = vcmask 1044480
    %v511 = vsel %vm509, %v67, 0
    %513 = vmatprep.subr.bf16.mxu0 0
    %514 = vmatpush1.bf16.msra.mxu0 0
    %515 = vmatprep.subr.bf16.mxu0 0
    %516 = vmatpush1.bf16.msra.mxu0 0
    %517 = vmatprep.subr.bf16.mxu0 0
    %518 = vmatpush1.bf16.msra.mxu0 0
    %519 = vmatprep.subr.bf16.mxu0 0
    %520 = vmatpush1.bf16.msra.mxu0 0
    %521 = vmatprep.subr.bf16.mxu0 0
    %522 = vmatpush1.bf16.msra.mxu0 0
    %523 = vmatprep.subr.bf16.mxu0 0
    %524 = vmatpush1.bf16.msra.mxu0 0
    %525 = vmatprep.subr.bf16.mxu0 0
    %526 = vmatpush1.bf16.msra.mxu0 0
    %527 = vmatprep.subr.bf16.mxu0 0
    %528 = vmatpush1.bf16.msra.mxu0 %v511
    %529 = vmatprep.subr.bf16.mxu0 0
    %530 = vmatpush2.bf16.msra.mxu0 0
    %531 = vmatprep.subr.bf16.mxu0 0
    %532 = vmatpush2.bf16.msra.mxu0 0
    %533 = vmatprep.subr.bf16.mxu0 0
    %534 = vmatpush2.bf16.msra.mxu0 0
    %535 = vmatprep.subr.bf16.mxu0 0
    %536 = vmatpush2.bf16.msra.mxu0 0
    %537 = vmatprep.subr.bf16.mxu0 0
    %538 = vmatpush2.bf16.msra.mxu0 0
    %539 = vmatprep.subr.bf16.mxu0 0
    %540 = vmatpush2.bf16.msra.mxu0 0
    %541 = vmatprep.subr.bf16.mxu0 0
    %542 = vmatpush2.bf16.msra.mxu0 0
    %543 = vmatprep.subr.bf16.mxu0 0
    %544 = vmatpush2.bf16.msra.mxu0 0
    %545 = vmatprep.mubr.bf16.mxu0 0
    %546 = vmatmul.mubr.bf16.gmra.mxu0 %v450
    %v547 = vpop.f32.mrf.mxu0
    %v548 = vadd.f32 %v151, %v547
    %v549 = vpop.f32.mrf.mxu0
    %v550 = vpop.f32.mrf.mxu0
    %v551 = vadd.f32 %v156, %v550
    %v552 = vpop.f32.mrf.mxu0
    %553 = vmatprep.mubr.bf16.mxu0 0
    %554 = vmatmul.mubr.bf16.gmra.mxu0 %v453
    %v555 = vpop.f32.mrf.mxu0
    %v556 = vadd.f32 %v161, %v555
    %v557 = vpop.f32.mrf.mxu0
    %v558 = vpop.f32.mrf.mxu0
    %v559 = vadd.f32 %v166, %v558
    %v560 = vpop.f32.mrf.mxu0
    %561 = vmatprep.mubr.bf16.mxu0 0
    %562 = vmatmul.mubr.bf16.gmra.mxu0 %v456
    %v563 = vpop.f32.mrf.mxu0
    %v564 = vadd.f32 %v171, %v563
    %v565 = vpop.f32.mrf.mxu0
    %v566 = vpop.f32.mrf.mxu0
    %v567 = vadd.f32 %v176, %v566
    %v568 = vpop.f32.mrf.mxu0
    %569 = vmatprep.mubr.bf16.mxu0 0
    %570 = vmatmul.mubr.bf16.gmra.mxu0 %v459
    %v571 = vpop.f32.mrf.mxu0
    %v572 = vadd.f32 %v181, %v571
    %v573 = vpop.f32.mrf.mxu0
    %v574 = vpop.f32.mrf.mxu0
    %v575 = vadd.f32 %v186, %v574
    %v576 = vpop.f32.mrf.mxu0
    %577 = vmatprep.mubr.bf16.mxu0 0
    %578 = vmatmul.mubr.bf16.gmra.mxu0 %v462
    %v579 = vpop.f32.mrf.mxu0
    %v580 = vadd.f32 %v191, %v579
    %v581 = vpop.f32.mrf.mxu0
    %v582 = vpop.f32.mrf.mxu0
    %v583 = vadd.f32 %v196, %v582
    %v584 = vpop.f32.mrf.mxu0
    %585 = vmatprep.mubr.bf16.mxu0 0
    %586 = vmatmul.mubr.bf16.gmra.mxu0 %v465
    %v587 = vpop.f32.mrf.mxu0
    %v588 = vadd.f32 %v201, %v587
    %v589 = vpop.f32.mrf.mxu0
    %v590 = vpop.f32.mrf.mxu0
    %v591 = vadd.f32 %v206, %v590
    %v592 = vpop.f32.mrf.mxu0
    %593 = vmatprep.mubr.bf16.mxu0 0
    %594 = vmatmul.mubr.bf16.gmra.mxu0 %v468
    %v595 = vpop.f32.mrf.mxu0
    %v596 = vadd.f32 %v211, %v595
    %v597 = vpop.f32.mrf.mxu0
    %v598 = vpop.f32.mrf.mxu0
    %v599 = vadd.f32 %v216, %v598
    %v600 = vpop.f32.mrf.mxu0
    %601 = vmatprep.mubr.bf16.mxu0 0
    %602 = vmatmul.mubr.bf16.gmra.mxu0 %v471
    %v603 = vpop.f32.mrf.mxu0
    %v604 = vadd.f32 %v221, %v603
    %v605 = vpop.f32.mrf.mxu0
    %v606 = vpop.f32.mrf.mxu0
    %v607 = vadd.f32 %v226, %v606
    %v608 = vpop.f32.mrf.mxu0
    %609 = vmatprep.mubr.bf16.mxu0 0
    %610 = vmatmul.mubr.bf16.gmra.mxu0 %v474
    %v611 = vpop.f32.mrf.mxu0
    %v612 = vadd.f32 %v231, %v611
    %v613 = vpop.f32.mrf.mxu0
    %v614 = vpop.f32.mrf.mxu0
    %v615 = vadd.f32 %v236, %v614
    %v616 = vpop.f32.mrf.mxu0
    %617 = vmatprep.mubr.bf16.mxu0 0
    %618 = vmatmul.mubr.bf16.gmra.mxu0 %v477
    %v619 = vpop.f32.mrf.mxu0
    %v620 = vadd.f32 %v241, %v619
    %v621 = vpop.f32.mrf.mxu0
    %v622 = vpop.f32.mrf.mxu0
    %v623 = vadd.f32 %v246, %v622
    %v624 = vpop.f32.mrf.mxu0
    %625 = vmatprep.mubr.bf16.mxu0 0
    %626 = vmatmul.mubr.bf16.gmra.mxu0 %v480
    %v627 = vpop.f32.mrf.mxu0
    %v628 = vadd.f32 %v251, %v627
    %v629 = vpop.f32.mrf.mxu0
    %v630 = vpop.f32.mrf.mxu0
    %v631 = vadd.f32 %v256, %v630
    %v632 = vpop.f32.mrf.mxu0
    %633 = vmatprep.mubr.bf16.mxu0 0
    %634 = vmatmul.mubr.bf16.gmra.mxu0 %v483
    %v635 = vpop.f32.mrf.mxu0
    %v636 = vadd.f32 %v261, %v635
    %v637 = vpop.f32.mrf.mxu0
    %v638 = vpop.f32.mrf.mxu0
    %v639 = vadd.f32 %v266, %v638
    %v640 = vpop.f32.mrf.mxu0
    %641 = vmatprep.mubr.bf16.mxu0 0
    %642 = vmatmul.mubr.bf16.gmra.mxu0 %v486
    %v643 = vpop.f32.mrf.mxu0
    %v644 = vadd.f32 %v271, %v643
    %v645 = vpop.f32.mrf.mxu0
    %v646 = vpop.f32.mrf.mxu0
    %v647 = vadd.f32 %v276, %v646
    %v648 = vpop.f32.mrf.mxu0
    %649 = vmatprep.mubr.bf16.mxu0 0
    %650 = vmatmul.mubr.bf16.gmra.mxu0 %v489
    %v651 = vpop.f32.mrf.mxu0
    %v652 = vadd.f32 %v281, %v651
    %v653 = vpop.f32.mrf.mxu0
    %v654 = vpop.f32.mrf.mxu0
    %v655 = vadd.f32 %v286, %v654
    %v656 = vpop.f32.mrf.mxu0
    %657 = vmatprep.mubr.bf16.mxu0 0
    %658 = vmatmul.mubr.bf16.gmra.mxu0 %v492
    %v659 = vpop.f32.mrf.mxu0
    %v660 = vadd.f32 %v291, %v659
    %v661 = vpop.f32.mrf.mxu0
    %v662 = vpop.f32.mrf.mxu0
    %v663 = vadd.f32 %v296, %v662
    %v664 = vpop.f32.mrf.mxu0
    %665 = vmatprep.mubr.bf16.mxu0 0
    %666 = vmatmul.mubr.bf16.gmra.mxu0 %v495
    %v667 = vpop.f32.mrf.mxu0
    %v668 = vadd.f32 %v301, %v667
    %v669 = vpop.f32.mrf.mxu0
    %v670 = vpop.f32.mrf.mxu0
    %v671 = vadd.f32 %v306, %v670
    %v672 = vpop.f32.mrf.mxu0
    %673 = vmatprep.mubr.bf16.mxu0 0
    %674 = vmatmul.mubr.bf16.gmra.mxu0 %v498
    %v675 = vpop.f32.mrf.mxu0
    %v676 = vadd.f32 %v311, %v675
    %v677 = vpop.f32.mrf.mxu0
    %v678 = vpop.f32.mrf.mxu0
    %v679 = vadd.f32 %v316, %v678
    %v680 = vpop.f32.mrf.mxu0
    %681 = vmatprep.mubr.bf16.mxu0 0
    %682 = vmatmul.mubr.bf16.gmra.mxu0 %v501
    %v683 = vpop.f32.mrf.mxu0
    %v684 = vadd.f32 %v321, %v683
    %v685 = vpop.f32.mrf.mxu0
    %v686 = vpop.f32.mrf.mxu0
    %v687 = vadd.f32 %v326, %v686
    %v688 = vpop.f32.mrf.mxu0
    %689 = vmatprep.mubr.bf16.mxu0 0
    %690 = vmatmul.mubr.bf16.gmra.mxu0 %v504
    %v691 = vpop.f32.mrf.mxu0
    %v692 = vadd.f32 %v331, %v691
    %v693 = vpop.f32.mrf.mxu0
    %v694 = vpop.f32.mrf.mxu0
    %v695 = vadd.f32 %v336, %v694
    %v696 = vpop.f32.mrf.mxu0
    %697 = vmatprep.mubr.bf16.mxu0 0
    %698 = vmatmul.mubr.bf16.gmra.mxu0 %v507
    %v699 = vpop.f32.mrf.mxu0
    %v700 = vadd.f32 %v341, %v699
    %v701 = vpop.f32.mrf.mxu0
    %v702 = vpop.f32.mrf.mxu0
    %v703 = vadd.f32 %v346, %v702
    %v704 = vpop.f32.mrf.mxu0
    %705 = vdwg.mxu0
    %v706 = vmax.f32 %v548, %v628
    %v707 = vmax.f32 %v551, %v631
    %v708 = vmax.f32 %v556, %v636
    %v709 = vmax.f32 %v559, %v639
    %v710 = vmax.f32 %v564, %v644
    %v711 = vmax.f32 %v567, %v647
    %v712 = vmax.f32 %v572, %v652
    %v713 = vmax.f32 %v575, %v655
    %v714 = vmax.f32 %v580, %v660
    %v715 = vmax.f32 %v583, %v663
    %v716 = vmax.f32 %v588, %v668
    %v717 = vmax.f32 %v591, %v671
    %v718 = vmax.f32 %v596, %v676
    %v719 = vmax.f32 %v599, %v679
    %v720 = vmax.f32 %v604, %v684
    %v721 = vmax.f32 %v607, %v687
    %v722 = vmax.f32 %v612, %v692
    %v723 = vmax.f32 %v615, %v695
    %v724 = vmax.f32 %v620, %v700
    %v725 = vmax.f32 %v623, %v703
    %v726 = vmax.f32 %v706, 0.0
    %v727 = vmax.f32 %v707, 0.0
    %v728 = vmax.f32 %v708, 0.0
    %v729 = vmax.f32 %v709, 0.0
    %v730 = vmax.f32 %v710, 0.0
    %v731 = vmax.f32 %v711, 0.0
    %v732 = vmax.f32 %v712, 0.0
    %v733 = vmax.f32 %v713, 0.0
    %v734 = vmax.f32 %v714, 0.0
    %v735 = vmax.f32 %v715, 0.0
    %v736 = vmax.f32 %v716, 0.0
    %v737 = vmax.f32 %v717, 0.0
    %v738 = vmax.f32 %v718, 0.0
    %v739 = vmax.f32 %v719, 0.0
    %v740 = vmax.f32 %v720, 0.0
    %v741 = vmax.f32 %v721, 0.0
    %v742 = vmax.f32 %v722, 0.0
    %v743 = vmax.f32 %v723, 0.0
    %v744 = vmax.f32 %v724, 0.0
    %v745 = vmax.f32 %v725, 0.0
    %v746 = vld [vmem:[%s3] sm:$0xff]
    %v747 = vld [vmem:[%s3 + $0x8] sm:$0xff]
    %v748 = vld [vmem:[%s3 + $0x10] sm:$0xff]
    %v749 = vld [vmem:[%s3 + $0x18] sm:$0xff]
    %v750 = vld [vmem:[%s3 + $0x20] sm:$0xff]
    %v751 = vld [vmem:[%s3 + $0x28] sm:$0xff]
    %v752 = vld [vmem:[%s3 + $0x30] sm:$0xff]
    %v753 = vld [vmem:[%s3 + $0x38] sm:$0xff]
    %v754 = vld [vmem:[%s3 + $0x40] sm:$0xff]
    %v755 = vld [vmem:[%s3 + $0x48] sm:$0xff]
    %v756 = vld [vmem:[%s3 + $0x50] sm:$0xff]
    %v757 = vld [vmem:[%s3 + $0x58] sm:$0xff]
    %v758 = vld [vmem:[%s3 + $0x60] sm:$0xff]
    %v759 = vld [vmem:[%s3 + $0x68] sm:$0xff]
    %v760 = vld [vmem:[%s3 + $0x70] sm:$0xff]
    %v761 = vld [vmem:[%s3 + $0x78] sm:$0xff]
    %v762 = vpack.c.bf16 %v727, %v726
    %v763 = vpack.c.bf16 %v729, %v728
    %v764 = vpack.c.bf16 %v731, %v730
    %v765 = vpack.c.bf16 %v733, %v732
    %v766 = vpack.c.bf16 %v735, %v734
    %v767 = vpack.c.bf16 %v737, %v736
    %v768 = vpack.c.bf16 %v739, %v738
    %v769 = vpack.c.bf16 %v741, %v740
    %v770 = vpack.c.bf16 %v743, %v742
    %v771 = vpack.c.bf16 %v745, %v744
    %v772 = vld [vmem:[%s4] sm:$0xff]
    %v773 = vld [vmem:[%s4 + $0x8] sm:$0xff]
    %v774 = vld [vmem:[%s4 + $0x10] sm:$0xff]
    %v775 = vld [vmem:[%s4 + $0x18] sm:$0xff]
    %v776 = vld [vmem:[%s4 + $0x20] sm:$0xff]
    %v777 = vld [vmem:[%s4 + $0x28] sm:$0xff]
    %v778 = vld [vmem:[%s4 + $0x30] sm:$0xff]
    %v779 = vld [vmem:[%s4 + $0x38] sm:$0xff]
    %v780 = vld [vmem:[%s4 + $0x40] sm:$0xff]
    %v781 = vld [vmem:[%s4 + $0x48] sm:$0xff]
    %v782 = vld [vmem:[%s4 + $0x50] sm:$0xff]
    %v783 = vld [vmem:[%s4 + $0x58] sm:$0xff]
    %v784 = vld [vmem:[%s4 + $0x60] sm:$0xff]
    %v785 = vld [vmem:[%s4 + $0x68] sm:$0xff]
    %v786 = vld [vmem:[%s4 + $0x70] sm:$0xff]
    %v787 = vld [vmem:[%s4 + $0x78] sm:$0xff]
    %789 = vset.pattern.permute.xlu0 0
    %790 = vperm.xlu0 %789, %v772
    %v791 = vpop.permute.xlu0 %790
    %794 = vset.pattern.permute.xlu0 0
    %795 = vperm.xlu0 %794, %v773
    %v796 = vpop.permute.xlu0 %795
    %799 = vset.pattern.permute.xlu0 0
    %800 = vperm.xlu0 %799, %v774
    %v801 = vpop.permute.xlu0 %800
    %804 = vset.pattern.permute.xlu0 0
    %805 = vperm.xlu0 %804, %v775
    %v806 = vpop.permute.xlu0 %805
    %809 = vset.pattern.permute.xlu0 0
    %810 = vperm.xlu0 %809, %v776
    %v811 = vpop.permute.xlu0 %810
    %814 = vset.pattern.permute.xlu0 0
    %815 = vperm.xlu0 %814, %v777
    %v816 = vpop.permute.xlu0 %815
    %819 = vset.pattern.permute.xlu0 0
    %820 = vperm.xlu0 %819, %v778
    %v821 = vpop.permute.xlu0 %820
    %824 = vset.pattern.permute.xlu0 0
    %825 = vperm.xlu0 %824, %v779
    %v826 = vpop.permute.xlu0 %825
    %829 = vset.pattern.permute.xlu0 0
    %830 = vperm.xlu0 %829, %v780
    %v831 = vpop.permute.xlu0 %830
    %834 = vset.pattern.permute.xlu0 0
    %835 = vperm.xlu0 %834, %v781
    %v836 = vpop.permute.xlu0 %835
    %839 = vset.pattern.permute.xlu0 0
    %840 = vperm.xlu0 %839, %v782
    %v841 = vpop.permute.xlu0 %840
    %844 = vset.pattern.permute.xlu0 0
    %845 = vperm.xlu0 %844, %v783
    %v846 = vpop.permute.xlu0 %845
    %849 = vset.pattern.permute.xlu0 0
    %850 = vperm.xlu0 %849, %v784
    %v851 = vpop.permute.xlu0 %850
    %854 = vset.pattern.permute.xlu0 0
    %855 = vperm.xlu0 %854, %v785
    %v856 = vpop.permute.xlu0 %855
    %859 = vset.pattern.permute.xlu0 0
    %860 = vperm.xlu0 %859, %v786
    %v861 = vpop.permute.xlu0 %860
    %864 = vset.pattern.permute.xlu0 0
    %865 = vperm.xlu0 %864, %v787
    %v866 = vpop.permute.xlu0 %865
    %v884 = vunpack.c.l.b16 %v746
    %v885 = vunpack.c.h.b16 %v746
    %v886 = vunpack.c.l.b16 %v747
    %v887 = vunpack.c.h.b16 %v747
    %v888 = vunpack.c.l.b16 %v748
    %v889 = vunpack.c.h.b16 %v748
    %v890 = vunpack.c.l.b16 %v749
    %v891 = vunpack.c.h.b16 %v749
    %v892 = vunpack.c.l.b16 %v750
    %v893 = vunpack.c.h.b16 %v750
    %v894 = vunpack.c.l.b16 %v751
    %v895 = vunpack.c.h.b16 %v751
    %v896 = vunpack.c.l.b16 %v752
    %v897 = vunpack.c.h.b16 %v752
    %v898 = vunpack.c.l.b16 %v753
    %v899 = vunpack.c.h.b16 %v753
    %v900 = vunpack.c.l.b16 %v754
    %v901 = vunpack.c.h.b16 %v754
    %v902 = vunpack.c.l.b16 %v755
    %v903 = vunpack.c.h.b16 %v755
    %v904 = vunpack.c.l.b16 %v756
    %v905 = vunpack.c.h.b16 %v756
    %v906 = vunpack.c.l.b16 %v757
    %v907 = vunpack.c.h.b16 %v757
    %v908 = vunpack.c.l.b16 %v758
    %v909 = vunpack.c.h.b16 %v758
    %v910 = vunpack.c.l.b16 %v759
    %v911 = vunpack.c.h.b16 %v759
    %v912 = vunpack.c.l.b16 %v760
    %v913 = vunpack.c.h.b16 %v760
    %v914 = vunpack.c.l.b16 %v761
    %v915 = vunpack.c.h.b16 %v761
    %v916 = vpack.c.b16 %v886, %v884
    %v917 = vpack.c.b16 %v887, %v885
    %v918 = vpack.c.b16 %v890, %v888
    %v919 = vpack.c.b16 %v891, %v889
    %v920 = vpack.c.b16 %v894, %v892
    %v921 = vpack.c.b16 %v895, %v893
    %v922 = vpack.c.b16 %v898, %v896
    %v923 = vpack.c.b16 %v899, %v897
    %v924 = vpack.c.b16 %v902, %v900
    %v925 = vpack.c.b16 %v903, %v901
    %v926 = vpack.c.b16 %v906, %v904
    %v927 = vpack.c.b16 %v907, %v905
    %v928 = vpack.c.b16 %v910, %v908
    %v929 = vpack.c.b16 %v911, %v909
    %v930 = vpack.c.b16 %v914, %v912
    %v931 = vpack.c.b16 %v915, %v913
    %vm940 = vcmask 261120
    %v942 = vsel %vm940, %v917, 0
    %v945 = vsel %vm940, %v919, 0
    %v948 = vsel %vm940, %v921, 0
    %v951 = vsel %vm940, %v923, 0
    %v954 = vsel %vm940, %v925, 0
    %v957 = vsel %vm940, %v927, 0
    %v960 = vsel %vm940, %v929, 0
    %v963 = vsel %vm940, %v931, 0
    %965 = vmatprep.subr.bf16.mxu0 0
    %966 = vmatpush1.bf16.msra.mxu0 %v769
    %967 = vmatprep.subr.bf16.mxu0 0
    %968 = vmatpush1.bf16.msra.mxu0 %v768
    %969 = vmatprep.subr.bf16.mxu0 0
    %970 = vmatpush1.bf16.msra.mxu0 %v767
    %971 = vmatprep.subr.bf16.mxu0 0
    %972 = vmatpush1.bf16.msra.mxu0 %v766
    %973 = vmatprep.subr.bf16.mxu0 0
    %974 = vmatpush1.bf16.msra.mxu0 %v765
    %975 = vmatprep.subr.bf16.mxu0 0
    %976 = vmatpush1.bf16.msra.mxu0 %v764
    %977 = vmatprep.subr.bf16.mxu0 0
    %978 = vmatpush1.bf16.msra.mxu0 %v763
    %979 = vmatprep.subr.bf16.mxu0 0
    %980 = vmatpush1.bf16.msra.mxu0 %v762
    %981 = vmatprep.subr.bf16.mxu0 0
    %982 = vmatpush2.bf16.msra.mxu0 0
    %983 = vmatprep.subr.bf16.mxu0 0
    %984 = vmatpush2.bf16.msra.mxu0 0
    %985 = vmatprep.subr.bf16.mxu0 0
    %986 = vmatpush2.bf16.msra.mxu0 0
    %987 = vmatprep.subr.bf16.mxu0 0
    %988 = vmatpush2.bf16.msra.mxu0 0
    %989 = vmatprep.subr.bf16.mxu0 0
    %990 = vmatpush2.bf16.msra.mxu0 0
    %991 = vmatprep.subr.bf16.mxu0 0
    %992 = vmatpush2.bf16.msra.mxu0 0
    %993 = vmatprep.subr.bf16.mxu0 0
    %994 = vmatpush2.bf16.msra.mxu0 %v771
    %995 = vmatprep.subr.bf16.mxu0 0
    %996 = vmatpush2.bf16.msra.mxu0 %v770
    %997 = vmatprep.mubr.bf16.mxu0 %v942
    %998 = vmatmul.mubr.bf16.gmra.mxu0 %v916
    %v999 = vpop.f32.mrf.mxu0
    %v1000 = vadd.f32 %v791, %v999
    %v1001 = vpop.f32.mrf.mxu0
    %v1002 = vpop.f32.mrf.mxu0
    %v1003 = vadd.f32 %v796, %v1002
    %v1004 = vpop.f32.mrf.mxu0
    %1005 = vmatprep.mubr.bf16.mxu0 %v945
    %1006 = vmatmul.mubr.bf16.gmra.mxu0 %v918
    %v1007 = vpop.f32.mrf.mxu0
    %v1008 = vadd.f32 %v801, %v1007
    %v1009 = vpop.f32.mrf.mxu0
    %v1010 = vpop.f32.mrf.mxu0
    %v1011 = vadd.f32 %v806, %v1010
    %v1012 = vpop.f32.mrf.mxu0
    %1013 = vmatprep.mubr.bf16.mxu0 %v948
    %1014 = vmatmul.mubr.bf16.gmra.mxu0 %v920
    %v1015 = vpop.f32.mrf.mxu0
    %v1016 = vadd.f32 %v811, %v1015
    %v1017 = vpop.f32.mrf.mxu0
    %v1018 = vpop.f32.mrf.mxu0
    %v1019 = vadd.f32 %v816, %v1018
    %v1020 = vpop.f32.mrf.mxu0
    %1021 = vmatprep.mubr.bf16.mxu0 %v951
    %1022 = vmatmul.mubr.bf16.gmra.mxu0 %v922
    %v1023 = vpop.f32.mrf.mxu0
    %v1024 = vadd.f32 %v821, %v1023
    %v1025 = vpop.f32.mrf.mxu0
    %v1026 = vpop.f32.mrf.mxu0
    %v1027 = vadd.f32 %v826, %v1026
    %v1028 = vpop.f32.mrf.mxu0
    %1029 = vmatprep.mubr.bf16.mxu0 %v954
    %1030 = vmatmul.mubr.bf16.gmra.mxu0 %v924
    %v1031 = vpop.f32.mrf.mxu0
    %v1032 = vadd.f32 %v831, %v1031
    %v1033 = vpop.f32.mrf.mxu0
    %v1034 = vpop.f32.mrf.mxu0
    %v1035 = vadd.f32 %v836, %v1034
    %v1036 = vpop.f32.mrf.mxu0
    %1037 = vmatprep.mubr.bf16.mxu0 %v957
    %1038 = vmatmul.mubr.bf16.gmra.mxu0 %v926
    %v1039 = vpop.f32.mrf.mxu0
    %v1040 = vadd.f32 %v841, %v1039
    %v1041 = vpop.f32.mrf.mxu0
    %v1042 = vpop.f32.mrf.mxu0
    %v1043 = vadd.f32 %v846, %v1042
    %v1044 = vpop.f32.mrf.mxu0
    %1045 = vmatprep.mubr.bf16.mxu0 %v960
    %1046 = vmatmul.mubr.bf16.gmra.mxu0 %v928
    %v1047 = vpop.f32.mrf.mxu0
    %v1048 = vadd.f32 %v851, %v1047
    %v1049 = vpop.f32.mrf.mxu0
    %v1050 = vpop.f32.mrf.mxu0
    %v1051 = vadd.f32 %v856, %v1050
    %v1052 = vpop.f32.mrf.mxu0
    %1053 = vmatprep.mubr.bf16.mxu0 %v963
    %1054 = vmatmul.mubr.bf16.gmra.mxu0 %v930
    %v1055 = vpop.f32.mrf.mxu0
    %v1056 = vadd.f32 %v861, %v1055
    %v1057 = vpop.f32.mrf.mxu0
    %v1058 = vpop.f32.mrf.mxu0
    %v1059 = vadd.f32 %v866, %v1058
    %v1060 = vpop.f32.mrf.mxu0
    %1061 = vdwg.mxu0
    %v1062 = vmax.f32 %v1000, 0.0
    %v1063 = vmax.f32 %v1003, 0.0
    %v1064 = vmax.f32 %v1008, 0.0
    %v1065 = vmax.f32 %v1011, 0.0
    %v1066 = vmax.f32 %v1016, 0.0
    %v1067 = vmax.f32 %v1019, 0.0
    %v1068 = vmax.f32 %v1024, 0.0
    %v1069 = vmax.f32 %v1027, 0.0
    %v1070 = vmax.f32 %v1032, 0.0
    %v1071 = vmax.f32 %v1035, 0.0
    %v1072 = vmax.f32 %v1040, 0.0
    %v1073 = vmax.f32 %v1043, 0.0
    %v1074 = vmax.f32 %v1048, 0.0
    %v1075 = vmax.f32 %v1051, 0.0
    %v1076 = vmax.f32 %v1056, 0.0
    %v1077 = vmax.f32 %v1059, 0.0
    %v1078 = vld [vmem:[%s5] sm:$0xf]
    %v1079 = vld [vmem:[%s5 + $0x4] sm:$0xf]
    %v1080 = vld [vmem:[%s5 + $0x8] sm:$0xf]
    %v1081 = vld [vmem:[%s5 + $0xc] sm:$0xf]
    %v1082 = vld [vmem:[%s5 + $0x10] sm:$0xf]
    %v1083 = vld [vmem:[%s5 + $0x14] sm:$0xf]
    %v1084 = vld [vmem:[%s5 + $0x18] sm:$0xf]
    %v1085 = vld [vmem:[%s5 + $0x1c] sm:$0xf]
    %v1086 = vpack.c.bf16 %v1063, %v1062
    %v1087 = vpack.c.bf16 %v1065, %v1064
    %v1088 = vpack.c.bf16 %v1067, %v1066
    %v1089 = vpack.c.bf16 %v1069, %v1068
    %v1090 = vpack.c.bf16 %v1071, %v1070
    %v1091 = vpack.c.bf16 %v1073, %v1072
    %v1092 = vpack.c.bf16 %v1075, %v1074
    %v1093 = vpack.c.bf16 %v1077, %v1076
    %v1094 = vld [vmem:[%s6] sm:$0xff]
    %v1095 = vld [vmem:[%s6 + $0x8] sm:$0xff]
    %v1096 = vld [vmem:[%s6 + $0x10] sm:$0xff]
    %v1097 = vld [vmem:[%s6 + $0x18] sm:$0xff]
    %v1098 = vld [vmem:[%s6 + $0x20] sm:$0xff]
    %v1099 = vld [vmem:[%s6 + $0x28] sm:$0xff]
    %v1100 = vld [vmem:[%s6 + $0x30] sm:$0xff]
    %v1101 = vld [vmem:[%s6 + $0x38] sm:$0xff]
    %1103 = vset.pattern.permute.xlu0 0
    %1104 = vperm.xlu0 %1103, %v1094
    %v1105 = vpop.permute.xlu0 %1104
    %1108 = vset.pattern.permute.xlu0 0
    %1109 = vperm.xlu0 %1108, %v1095
    %v1110 = vpop.permute.xlu0 %1109
    %1113 = vset.pattern.permute.xlu0 0
    %1114 = vperm.xlu0 %1113, %v1096
    %v1115 = vpop.permute.xlu0 %1114
    %1118 = vset.pattern.permute.xlu0 0
    %1119 = vperm.xlu0 %1118, %v1097
    %v1120 = vpop.permute.xlu0 %1119
    %1123 = vset.pattern.permute.xlu0 0
    %1124 = vperm.xlu0 %1123, %v1098
    %v1125 = vpop.permute.xlu0 %1124
    %1128 = vset.pattern.permute.xlu0 0
    %1129 = vperm.xlu0 %1128, %v1099
    %v1130 = vpop.permute.xlu0 %1129
    %1133 = vset.pattern.permute.xlu0 0
    %1134 = vperm.xlu0 %1133, %v1100
    %v1135 = vpop.permute.xlu0 %1134
    %1138 = vset.pattern.permute.xlu0 0
    %1139 = vperm.xlu0 %1138, %v1101
    %v1140 = vpop.permute.xlu0 %1139
    %v1150 = vunpack.c.l.b16 %v1078
    %v1151 = vunpack.c.l.b16 %v1079
    %v1152 = vunpack.c.l.b16 %v1080
    %v1153 = vunpack.c.l.b16 %v1081
    %v1154 = vunpack.c.l.b16 %v1082
    %v1155 = vunpack.c.l.b16 %v1083
    %v1156 = vunpack.c.l.b16 %v1084
    %v1157 = vunpack.c.l.b16 %v1085
    %v1158 = vpack.c.b16 %v1151, %v1150
    %v1159 = vpack.c.b16 %v1153, %v1152
    %v1160 = vpack.c.b16 %v1155, %v1154
    %v1161 = vpack.c.b16 %v1157, %v1156
    %1166 = vmatprep.subr.bf16.mxu0 0
    %1167 = vmatpush1.bf16.msra.mxu0 %v1093
    %1168 = vmatprep.subr.bf16.mxu0 0
    %1169 = vmatpush1.bf16.msra.mxu0 %v1092
    %1170 = vmatprep.subr.bf16.mxu0 0
    %1171 = vmatpush1.bf16.msra.mxu0 %v1091
    %1172 = vmatprep.subr.bf16.mxu0 0
    %1173 = vmatpush1.bf16.msra.mxu0 %v1090
    %1174 = vmatprep.subr.bf16.mxu0 0
    %1175 = vmatpush1.bf16.msra.mxu0 %v1089
    %1176 = vmatprep.subr.bf16.mxu0 0
    %1177 = vmatpush1.bf16.msra.mxu0 %v1088
    %1178 = vmatprep.subr.bf16.mxu0 0
    %1179 = vmatpush1.bf16.msra.mxu0 %v1087
    %1180 = vmatprep.subr.bf16.mxu0 0
    %1181 = vmatpush1.bf16.msra.mxu0 %v1086
    %1182 = vmatprep.subr.bf16.mxu0 0
    %1183 = vmatpush2.bf16.msra.mxu0 0
    %1184 = vmatprep.subr.bf16.mxu0 0
    %1185 = vmatpush2.bf16.msra.mxu0 0
    %1186 = vmatprep.subr.bf16.mxu0 0
    %1187 = vmatpush2.bf16.msra.mxu0 0
    %1188 = vmatprep.subr.bf16.mxu0 0
    %1189 = vmatpush2.bf16.msra.mxu0 0
    %1190 = vmatprep.subr.bf16.mxu0 0
    %1191 = vmatpush2.bf16.msra.mxu0 0
    %1192 = vmatprep.subr.bf16.mxu0 0
    %1193 = vmatpush2.bf16.msra.mxu0 0
    %1194 = vmatprep.subr.bf16.mxu0 0
    %1195 = vmatpush2.bf16.msra.mxu0 0
    %1196 = vmatprep.subr.bf16.mxu0 0
    %1197 = vmatpush2.bf16.msra.mxu0 0
    %1198 = vmatprep.mubr.bf16.mxu0 0
    %1199 = vmatmul.mubr.bf16.gmra.mxu0 %v1158
    %v1200 = vpop.f32.mrf.mxu0
    %v1201 = vadd.f32 %v1105, %v1200
    %v1202 = vpop.f32.mrf.mxu0
    %v1203 = vpop.f32.mrf.mxu0
    %v1204 = vadd.f32 %v1110, %v1203
    %v1205 = vpop.f32.mrf.mxu0
    %1206 = vmatprep.mubr.bf16.mxu0 0
    %1207 = vmatmul.mubr.bf16.gmra.mxu0 %v1159
    %v1208 = vpop.f32.mrf.mxu0
    %v1209 = vadd.f32 %v1115, %v1208
    %v1210 = vpop.f32.mrf.mxu0
    %v1211 = vpop.f32.mrf.mxu0
    %v1212 = vadd.f32 %v1120, %v1211
    %v1213 = vpop.f32.mrf.mxu0
    %1214 = vmatprep.mubr.bf16.mxu0 0
    %1215 = vmatmul.mubr.bf16.gmra.mxu0 %v1160
    %v1216 = vpop.f32.mrf.mxu0
    %v1217 = vadd.f32 %v1125, %v1216
    %v1218 = vpop.f32.mrf.mxu0
    %v1219 = vpop.f32.mrf.mxu0
    %v1220 = vadd.f32 %v1130, %v1219
    %v1221 = vpop.f32.mrf.mxu0
    %1222 = vmatprep.mubr.bf16.mxu0 0
    %1223 = vmatmul.mubr.bf16.gmra.mxu0 %v1161
    %v1224 = vpop.f32.mrf.mxu0
    %v1225 = vadd.f32 %v1135, %v1224
    %v1226 = vpop.f32.mrf.mxu0
    %v1227 = vpop.f32.mrf.mxu0
    %v1228 = vadd.f32 %v1140, %v1227
    %v1229 = vpop.f32.mrf.mxu0
    %1230 = vdwg.mxu0
    %v1231 = vmax.f32 %v1201, 0.0
    %v1232 = vmax.f32 %v1204, 0.0
    %v1233 = vmax.f32 %v1209, 0.0
    %v1234 = vmax.f32 %v1212, 0.0
    %v1235 = vmax.f32 %v1217, 0.0
    %v1236 = vmax.f32 %v1220, 0.0
    %v1237 = vmax.f32 %v1225, 0.0
    %v1238 = vmax.f32 %v1228, 0.0
    %v1239 = vld [vmem:[%s7] sm:$0x3]
    %v1240 = vpack.c.bf16 %v1232, %v1231
    %v1241 = vpack.c.bf16 %v1234, %v1233
    %v1242 = vpack.c.bf16 %v1236, %v1235
    %v1243 = vpack.c.bf16 %v1238, %v1237
    %v1244 = vld [vmem:[%s8] sm:$0x7]
    %1246 = vset.pattern.permute.xlu0 0
    %1247 = vperm.xlu0 %1246, %v1244
    %v1248 = vpop.permute.xlu0 %1247
    %vm1250 = vcmask 523264
    %v1252 = vsel %vm1250, %v1239, 0
    %1254 = vmatprep.subr.bf16.mxu0 0
    %1255 = vmatpush1.bf16.msra.mxu0 0
    %1256 = vmatprep.subr.bf16.mxu0 0
    %1257 = vmatpush1.bf16.msra.mxu0 0
    %1258 = vmatprep.subr.bf16.mxu0 0
    %1259 = vmatpush1.bf16.msra.mxu0 0
    %1260 = vmatprep.subr.bf16.mxu0 0
    %1261 = vmatpush1.bf16.msra.mxu0 0
    %1262 = vmatprep.subr.bf16.mxu0 0
    %1263 = vmatpush1.bf16.msra.mxu0 %v1243
    %1264 = vmatprep.subr.bf16.mxu0 0
    %1265 = vmatpush1.bf16.msra.mxu0 %v1242
    %1266 = vmatprep.subr.bf16.mxu0 0
    %1267 = vmatpush1.bf16.msra.mxu0 %v1241
    %1268 = vmatprep.subr.bf16.mxu0 0
    %1269 = vmatpush1.bf16.msra.mxu0 %v1240
    %1270 = vmatprep.subr.bf16.mxu0 0
    %1271 = vmatpush2.bf16.msra.mxu0 0
    %1272 = vmatprep.subr.bf16.mxu0 0
    %1273 = vmatpush2.bf16.msra.mxu0 0
    %1274 = vmatprep.subr.bf16.mxu0 0
    %1275 = vmatpush2.bf16.msra.mxu0 0
    %1276 = vmatprep.subr.bf16.mxu0 0
    %1277 = vmatpush2.bf16.msra.mxu0 0
    %1278 = vmatprep.subr.bf16.mxu0 0
    %1279 = vmatpush2.bf16.msra.mxu0 0
    %1280 = vmatprep.subr.bf16.mxu0 0
    %1281 = vmatpush2.bf16.msra.mxu0 0
    %1282 = vmatprep.subr.bf16.mxu0 0
    %1283 = vmatpush2.bf16.msra.mxu0 0
    %1284 = vmatprep.subr.bf16.mxu0 0
    %1285 = vmatpush2.bf16.msra.mxu0 0
    %1286 = vmatprep.mubr.bf16.mxu0 0
    %1287 = vmatmul.mubr.bf16.gmra.mxu0 %v1252
    %v1288 = vpop.f32.mrf.mxu0
    %v1289 = vadd.f32 %v1248, %v1288
    %v1290 = vpop.f32.mrf.mxu0
    %v1291 = vpop.f32.mrf.mxu0
    %v1292 = vpop.f32.mrf.mxu0
    %1293 = vdwg.mxu0
    %vm1294 = vcmask 59392
    %v1295 = vsel %vm1294, %v1289, -inf
    %v1296 = vrot.slane %v1295, 4
    %v1297 = vmax.f32 %v1295, %v1296
    %v1298 = vrot.slane %v1297, 2
    %v1299 = vmax.f32 %v1297, %v1298
    %v1300 = vrot.slane %v1299, 1
    %v1301 = vmax.f32 %v1299, %v1300
    %v1302 = vsub.f32 %v1289, %v1301
    %v1303 = vmul.f32 %v1302, 1.442695
    %v1304 = vpow.pop %v1303
    %v1305 = vsel %vm1294, %v1304, 0.0
    %v1306 = vrot.slane %v1305, 4
    %v1307 = vadd.f32 %v1305, %v1306
    %v1308 = vrot.slane %v1307, 2
    %v1309 = vadd.f32 %v1307, %v1308
    %v1310 = vrot.slane %v1309, 1
    %v1311 = vadd.f32 %v1309, %v1310
    %v1312 = vrcp.pop %v1311
    %v1313 = vmul.f32 %v1304, %v1312
    %1314 = vst.msk [vmem:[#allocation2] sm:$0x7] %vm1294, %v1313
    // Predicated region
    $region38: #{baseline_forward.1} parent=1 // pred_check
      _
    $region39: #{baseline_forward.1} parent=1 // pred_check_branch
      %1316 = sbr.rel (0) target = $region41
    $region40: #{baseline_forward.1} parent=1 // pred_region
      %s1318 = ssub.s32 64, 64
      %1319 = vsyncadd [#allocation3], %s1318
      %s1321 = sshll.u32 [#allocation2], 4
      %s1322 = int_to_ptr.vmem [resolvable:$true] %s1321
      %1324 = dma.vmem_to_hbm [thread:$0]  %s1322, 64, %s9, [#allocation3]
    $region41: #{baseline_forward.1} parent=1 // pred_fallthru
      _
    // Predicated region
    $region42: #{baseline_forward.1} parent=1 // pred_check
      _
    $region43: #{baseline_forward.1} parent=1 // pred_check_branch
      %1326 = sbr.rel (0) target = $region45
    $region44: #{baseline_forward.1} parent=1 // pred_region
      %1327 = dma.done [#allocation3], 64
    $region45: #{baseline_forward.1} parent=1 // pred_fallthru
      _
    %1328 = vsyncpa [#allocation3], 1

</llo_original>
